<compile_context>
chip_gen: v7x
topology: tpu7x:2x2x1
jax: 0.10.0
libtpu: 0.0.40
codegen_flags: <defaults>
</compile_context>

<pallas_src>
import functools

import jax
import jax.numpy as jnp
from jax.experimental import pallas as pl
from jax.experimental.pallas import tpu as pltpu


def _round_up(x, m):
    return ((x + m - 1) // m) * m


# ----------------------------------------------------------------------------
# Pallas kernel 1: fused DWT -> softshrink -> (alpha - v) -> IDWT (elementwise)
# ----------------------------------------------------------------------------
def _make_wavelet_kernel(thresh):
    # NOTE: `thresh` is closed over as a Python constant; beta is fixed at
    # module construction in the reference.  If beta varied at runtime we
    # would pass it as an SMEM scalar instead to avoid retracing.
    def kernel(x1_ref, x2_ref, x3_ref, x4_ref,
               o00_ref, o10_ref, o01_ref, o11_ref):
        # x1..x4 are the polyphase quadrants (even/odd rows/cols) of the image.
        x1 = x1_ref[...]
        x2 = x2_ref[...]
        x3 = x3_ref[...]
        x4 = x4_ref[...]
        # forward Haar DWT bands (x/2 scaling folded into the 0.5 factors)
        d_ll = 0.5 * (x1 + x2 + x3 + x4)
        d_hl = 0.5 * (-x1 - x2 + x3 + x4)
        d_lh = 0.5 * (-x1 + x2 - x3 + x4)
        d_hh = 0.5 * (x1 - x2 - x3 + x4)

        def z(d):
            # softshrink(d,t) = d - clip(d,-t,t)
            # alpha - v = 2*softshrink(d,t) - d = d - 2*clip(d,-t,t)
            # extra 0.5 = inverse-DWT scale, folded in.
            return 0.5 * d - jnp.clip(d, -thresh, thresh)

        z_ll, z_hl, z_lh, z_hh = z(d_ll), z(d_hl), z(d_lh), z(d_hh)
        # inverse Haar DWT -> four output quadrants
        o00_ref[...] = z_ll - z_hl - z_lh + z_hh   # even row, even col
        o10_ref[...] = z_ll - z_hl + z_lh - z_hh   # odd  row, even col
        o01_ref[...] = z_ll + z_hl - z_lh - z_hh   # even row, odd  col
        o11_ref[...] = z_ll + z_hl + z_lh + z_hh   # odd  row, odd  col

    return kernel


def fused_dwt_shrink_idwt(image, thresh):
    """image (B,C,H,W) -> idwt(alpha - v), same shape; math in Pallas."""
    B, C, H, W = image.shape
    Hh, Wh = H // 2, W // 2
    M = B * C
    R = M * Hh  # total quadrant rows; tiled along this axis

    # glue: polyphase split (pure data movement).
    # TODO(synk): the strided split/recombine is still one extra HBM pass on
    # each side of the kernel; fusing it via strided in-kernel refs is a
    # further optimization.
    xr = image.reshape(M, Hh, 2, Wh, 2)
    x1 = xr[:, :, 0, :, 0].reshape(R, Wh)
    x2 = xr[:, :, 1, :, 0].reshape(R, Wh)
    x3 = xr[:, :, 0, :, 1].reshape(R, Wh)
    x4 = xr[:, :, 1, :, 1].reshape(R, Wh)

    # pick a row tile: multiple of 8 dividing R (full array as fallback)
    tr = R
    for cand in (512, 256, 128, 64, 32, 16, 8):
        if R % cand == 0:
            tr = cand
            break

    spec = pl.BlockSpec((tr, Wh), lambda i: (i, 0))
    outs = pl.pallas_call(
        _make_wavelet_kernel(float(thresh)),
        out_shape=tuple(jax.ShapeDtypeStruct((R, Wh), jnp.float32)
                        for _ in range(4)),
        grid=(R // tr,),
        in_specs=[spec, spec, spec, spec],
        out_specs=(spec, spec, spec, spec),
        compiler_params=pltpu.CompilerParams(
            dimension_semantics=("parallel",)),
    )(x1, x2, x3, x4)
    o00, o10, o01, o11 = (o.reshape(M, Hh, Wh) for o in outs)

    # glue: reassemble quadrants into the full-resolution image
    row_even = jnp.stack([o00, o01], axis=-1)          # (M, Hh, Wh, 2)
    row_odd = jnp.stack([o10, o11], axis=-1)           # (M, Hh, Wh, 2)
    full = jnp.stack([row_even, row_odd], axis=2)      # (M, Hh, 2, Wh, 2)
    return full.reshape(B, C, H, W)


# ----------------------------------------------------------------------------
# Pallas kernel 2: matmul used by Sample / SampleTranspose / normal operator.
# Transposed im2col form: small (Mo, K) weight-like LHS, long lane-dense N.
# ----------------------------------------------------------------------------
def _matmul_kernel(a_ref, b_ref, o_ref):
    o_ref[...] = jnp.dot(a_ref[...], b_ref[...],
                         preferred_element_type=jnp.float32)


def pallas_matmul_t(lhs, rhs):
    """(Mo,K) @ (K,N) -> (Mo,N) float32, tiled over the long lane axis N.

    Mo and K are small (<= C*9); no HBM padding of Mo/K.  N is padded to a
    multiple of 128 only if needed (a no-op for the shapes used here).
    """
    Mo, K = lhs.shape
    _, N = rhs.shape
    Np = _round_up(N, 128)
    if Np != N:
        rhs = jnp.pad(rhs, ((0, 0), (0, Np - N)))
    tn = next(t for t in (2048, 1024, 512, 256, 128) if Np % t == 0)
    out = pl.pallas_call(
        _matmul_kernel,
        out_shape=jax.ShapeDtypeStruct((Mo, Np), jnp.float32),
        grid=(Np // tn,),
        in_specs=[pl.BlockSpec((Mo, K), lambda i: (0, 0)),
                  pl.BlockSpec((K, tn), lambda i: (0, i))],
        out_specs=pl.BlockSpec((Mo, tn), lambda i: (0, i)),
        compiler_params=pltpu.CompilerParams(
            dimension_semantics=("parallel",)),
    )(lhs, rhs)
    return out[:, :N] if Np != N else out


# ----------------------------------------------------------------------------
# Sample (3x3 stride-2 conv, pad 1), its exact adjoint, and the normal op.
# ----------------------------------------------------------------------------
def _im2col_T(x):
    """x (B,C,H,W) -> patches (C*9, B*Ho*Wo) of the 3x3/stride-2/pad-1 conv."""
    B, C, H, W = x.shape
    xp = jnp.pad(x, ((0, 0), (0, 0), (1, 1), (1, 1)))
    cols = []
    for kh in range(3):
        for kw in range(3):
            cols.append(xp[:, :, kh:kh + H:2, kw:kw + W:2])   # (B,C,Ho,Wo)
    pat = jnp.stack(cols, axis=0)                 # (9, B, C, Ho, Wo)
    pat = pat.transpose(2, 0, 1, 3, 4)            # (C, 9, B, Ho, Wo)
    return pat.reshape(C * 9, -1)


def _col2im_T(G_T, B, C, H, W):
    """Adjoint of _im2col_T: (C*9, B*Ho*Wo) -> (B,C,H,W) scatter-add."""
    Ho, Wo = H // 2, W // 2
    G = G_T.reshape(C, 9, B, Ho, Wo).transpose(2, 0, 1, 3, 4)  # (B,C,9,Ho,Wo)
    xp = jnp.zeros((B, C, H + 2, W + 2), jnp.float32)
    t = 0
    for kh in range(3):
        for kw in range(3):
            xp = xp.at[:, :, kh:kh + H:2, kw:kw + W:2].add(G[:, :, t])
            t += 1
    return xp[:, :, 1:H + 1, 1:W + 1]


def sample_forward(x, Wc):
    """x (B,C,H,W) -> (B,Cout,H/2,W/2). im2col (glue) + Pallas matmul."""
    B, C, H, W = x.shape
    Cout = Wc.shape[0]
    Ho, Wo = H // 2, W // 2
    A_T = _im2col_T(x)                                        # (C*9, N)
    out_T = pallas_matmul_t(Wc.reshape(Cout, -1), A_T)        # (Cout, N)
    return out_T.reshape(Cout, B, Ho, Wo).transpose(1, 0, 2, 3)


def sample_transpose(sy, Wc, H, W):
    """Exact adjoint: sy (B,Cout,Ho,Wo) -> (B,C,H,W)."""
    B, Cout, Ho, Wo = sy.shape
    C = Wc.shape[1]
    s_T = sy.transpose(1, 0, 2, 3).reshape(Cout, -1)          # (Cout, N)
    G_T = pallas_matmul_t(Wc.reshape(Cout, -1).T, s_T)        # (C*9, N)
    return _col2im_T(G_T, B, C, H, W)


def sample_normal(x, Wc, gram):
    """Sample^T(Sample(x)) in one im2col + matmul + col2im pass via Gram."""
    B, C, H, W = x.shape
    A_T = _im2col_T(x)                                        # (C*9, N)
    G_T = pallas_matmul_t(gram, A_T)                          # (C*9, N)
    return _col2im_T(G_T, B, C, H, W)


def _cstack(z):
    return jnp.concatenate([z.real, z.imag], axis=0)


def _csplit(x):
    b2 = x.shape[0]
    return jax.lax.complex(x[:b2 // 2], x[b2 // 2:])


def csample_t(s, Wc, H, W):
    # real & imag stacked along batch -> one Pallas matmul pass for both
    return _csplit(sample_transpose(_cstack(s), Wc, H, W))


def csample_normal(y, Wc, gram):
    return _csplit(sample_normal(_cstack(y), Wc, gram))


# ----------------------------------------------------------------------------
# SUnit.forward
# ----------------------------------------------------------------------------
def sunit_forward(s, image, Wc, *, lamda, beta):
    B, C, H, W = image.shape
    coeff = lamda / beta
    # dwt -> softshrink -> (alpha - v) -> idwt, fused in one Pallas kernel
    idwtx = fused_dwt_shrink_idwt(image, 1.0 / beta)
    # TODO(synk): fft2/ifft2 stay in jnp.fft (no Pallas FFT primitive on TPU).
    y1 = jnp.fft.fft2(idwtx)
    y2 = coeff * csample_t(s, Wc, H, W)
    y = y1 + y2
    # normal operator Sample^T Sample via the tiny precomputed Gram matrix
    w_flat = Wc.reshape(Wc.shape[0], -1)
    gram = w_flat.T @ w_flat          # (C*9, C*9) weight-side constant (glue)
    y = y + coeff * csample_normal(y, Wc, gram)
    return jnp.fft.ifft2(y)


if __name__ == "__main__":
    key = jax.random.PRNGKey(0)
    k1, k2, k3, k4 = jax.random.split(key, 4)

    B, C, H, W = 2, 3, 16, 16
    lamda, beta = 0.5, 1.0

    image = jax.random.normal(k1, (B, C, H, W), dtype=jnp.float32)
    s = jax.lax.complex(
        jax.random.normal(k2, (B, C, H // 2, W // 2), dtype=jnp.float32),
        jax.random.normal(k3, (B, C, H // 2, W // 2), dtype=jnp.float32))
    # Sample operator weight: Conv2d(C, C, 3, stride=2, pad=1, bias=False)
    Wc = 0.1 * jax.random.normal(k4, (C, C, 3, 3), dtype=jnp.float32)

    fwd = jax.jit(functools.partial(sunit_forward, lamda=lamda, beta=beta))
    out = fwd(s, image, Wc)
    jax.block_until_ready(out)

    assert out.shape == (B, C, H, W)
    assert jnp.iscomplexobj(out)
    assert bool(jnp.all(jnp.isfinite(out.real)) & jnp.all(jnp.isfinite(out.imag)))
    print("KERNEL_OK")
</pallas_src>

<mosaic_0001>
module attributes {stable_mosaic.version = 11 : i64} {
  func.func @_matmul_kernel(%arg0: i32, %arg1: memref<27x3xf32, #tpu.memory_space<vmem>>, %arg2: memref<3x256xf32, #tpu.memory_space<vmem>>, %arg3: memref<27x256xf32, #tpu.memory_space<vmem>>) attributes {dimension_semantics = [#tpu.dimension_semantics<parallel>], iteration_bounds = array<i64: 1>, scalar_prefetch = 0 : i64, scratch_operands = 0 : i64, tpu.core_type = #tpu.core_type<tc>, window_params = [{pipeline_mode = #tpu.pipeline_mode<synchronous>, transform_indices = @transform_0, window_bounds = array<i64: 27, 3>}, {transform_indices = @transform_1, window_bounds = array<i64: 3, 256>}, {transform_indices = @transform_2, window_bounds = array<i64: 27, 256>}]} {
    %c0 = arith.constant 0 : index
    %c0_0 = arith.constant 0 : index
    %0 = vector.load %arg1[%c0, %c0_0] : memref<27x3xf32, #tpu.memory_space<vmem>>, vector<27x3xf32>
    %c0_1 = arith.constant 0 : index
    %c0_2 = arith.constant 0 : index
    %1 = vector.load %arg2[%c0_1, %c0_2] : memref<3x256xf32, #tpu.memory_space<vmem>>, vector<3x256xf32>
    %cst = arith.constant dense<0.000000e+00> : vector<27x256xf32>
    %2 = tpu.matmul %0, %1, %cst {dimension_numbers = #tpu.dot_dimension_numbers<[1], [0], [0], [1], [0, 0, 1, 1], [], []>} : vector<27x3xf32>, vector<3x256xf32>, vector<27x256xf32> -> vector<27x256xf32>
    %c0_3 = arith.constant 0 : index
    %c0_4 = arith.constant 0 : index
    %3 = vector.load %arg3[%c0_3, %c0_4] : memref<27x256xf32, #tpu.memory_space<vmem>>, vector<27x256xf32>
    tpu.vector_store %arg3[%c0_3, %c0_4], %2 {strides = array<i32>} : memref<27x256xf32, #tpu.memory_space<vmem>>, vector<27x256xf32>,
    return
  }
  func.func @transform_0(%arg0: i32) -> (i32, i32) {
    %c0_i32 = arith.constant 0 : i32
    %c0_i32_0 = arith.constant 0 : i32
    %c0_i32_1 = arith.constant 0 : i32
    return %c0_i32, %c0_i32_0 : i32, i32
  }
  func.func @transform_1(%arg0: i32) -> (i32, i32) {
    %c0_i32 = arith.constant 0 : i32
    %c0_i32_0 = arith.constant 0 : i32
    return %c0_i32, %arg0 : i32, i32
  }
  func.func @transform_2(%arg0: i32) -> (i32, i32) {
    %c0_i32 = arith.constant 0 : i32
    %c0_i32_0 = arith.constant 0 : i32
    return %c0_i32, %arg0 : i32, i32
  }
}

module attributes {stable_mosaic.version = 11 : i64} {
  func.func @kernel(%arg0: i32, %arg1: memref<16x8xf32, #tpu.memory_space<vmem>>, %arg2: memref<16x8xf32, #tpu.memory_space<vmem>>, %arg3: memref<16x8xf32, #tpu.memory_space<vmem>>, %arg4: memref<16x8xf32, #tpu.memory_space<vmem>>, %arg5: memref<16x8xf32, #tpu.memory_space<vmem>>, %arg6: memref<16x8xf32, #tpu.memory_space<vmem>>, %arg7: memref<16x8xf32, #tpu.memory_space<vmem>>, %arg8: memref<16x8xf32, #tpu.memory_space<vmem>>) attributes {dimension_semantics = [#tpu.dimension_semantics<parallel>], iteration_bounds = array<i64: 3>, scalar_prefetch = 0 : i64, scratch_operands = 0 : i64, tpu.core_type = #tpu.core_type<tc>, window_params = [{transform_indices = @transform_0, window_bounds = array<i64: 16, 8>}, {transform_indices = @transform_1, window_bounds = array<i64: 16, 8>}, {transform_indices = @transform_2, window_bounds = array<i64: 16, 8>}, {transform_indices = @transform_3, window_bounds = array<i64: 16, 8>}, {transform_indices = @transform_4, window_bounds = array<i64: 16, 8>}, {transform_indices = @transform_5, window_bounds = array<i64: 16, 8>}, {transform_indices = @transform_6, window_bounds = array<i64: 16, 8>}, {transform_indices = @transform_7, window_bounds = array<i64: 16, 8>}]} {
    %c0 = arith.constant 0 : index
    %c0_0 = arith.constant 0 : index
    %0 = vector.load %arg1[%c0, %c0_0] : memref<16x8xf32, #tpu.memory_space<vmem>>, vector<16x8xf32>
    %c0_1 = arith.constant 0 : index
    %c0_2 = arith.constant 0 : index
    %1 = vector.load %arg2[%c0_1, %c0_2] : memref<16x8xf32, #tpu.memory_space<vmem>>, vector<16x8xf32>
    %c0_3 = arith.constant 0 : index
    %c0_4 = arith.constant 0 : index
    %2 = vector.load %arg3[%c0_3, %c0_4] : memref<16x8xf32, #tpu.memory_space<vmem>>, vector<16x8xf32>
    %c0_5 = arith.constant 0 : index
    %c0_6 = arith.constant 0 : index
    %3 = vector.load %arg4[%c0_5, %c0_6] : memref<16x8xf32, #tpu.memory_space<vmem>>, vector<16x8xf32>
    %4 = arith.addf %0, %1 : vector<16x8xf32>
    %5 = arith.addf %4, %2 : vector<16x8xf32>
    %6 = arith.addf %5, %3 : vector<16x8xf32>
    %cst = arith.constant 5.000000e-01 : f32
    %7 = vector.broadcast %cst : f32 to vector<16x8xf32>
    %8 = arith.mulf %7, %6 : vector<16x8xf32>
    %cst_7 = arith.constant 0.000000e+00 : f32
    %9 = vector.broadcast %cst_7 : f32 to vector<16x8xf32>
    %10 = arith.subf %9, %0 : vector<16x8xf32>
    %11 = arith.subf %10, %1 : vector<16x8xf32>
    %12 = arith.addf %11, %2 : vector<16x8xf32>
    %13 = arith.addf %12, %3 : vector<16x8xf32>
    %cst_8 = arith.constant 5.000000e-01 : f32
    %14 = vector.broadcast %cst_8 : f32 to vector<16x8xf32>
    %15 = arith.mulf %14, %13 : vector<16x8xf32>
    %cst_9 = arith.constant 0.000000e+00 : f32
    %16 = vector.broadcast %cst_9 : f32 to vector<16x8xf32>
    %17 = arith.subf %16, %0 : vector<16x8xf32>
    %18 = arith.addf %17, %1 : vector<16x8xf32>
    %19 = arith.subf %18, %2 : vector<16x8xf32>
    %20 = arith.addf %19, %3 : vector<16x8xf32>
    %cst_10 = arith.constant 5.000000e-01 : f32
    %21 = vector.broadcast %cst_10 : f32 to vector<16x8xf32>
    %22 = arith.mulf %21, %20 : vector<16x8xf32>
    %23 = arith.subf %0, %1 : vector<16x8xf32>
    %24 = arith.subf %23, %2 : vector<16x8xf32>
    %25 = arith.addf %24, %3 : vector<16x8xf32>
    %cst_11 = arith.constant 5.000000e-01 : f32
    %26 = vector.broadcast %cst_11 : f32 to vector<16x8xf32>
    %27 = arith.mulf %26, %25 : vector<16x8xf32>
    %cst_12 = arith.constant 5.000000e-01 : f32
    %28 = vector.broadcast %cst_12 : f32 to vector<16x8xf32>
    %29 = arith.mulf %28, %8 : vector<16x8xf32>
    %cst_13 = arith.constant -1.000000e+00 : f32
    %cst_14 = arith.constant 1.000000e+00 : f32
    %30 = vector.broadcast %cst_13 : f32 to vector<16x8xf32>
    %31 = arith.maximumf %30, %8 : vector<16x8xf32>
    %32 = vector.broadcast %cst_14 : f32 to vector<16x8xf32>
    %33 = arith.minimumf %32, %31 : vector<16x8xf32>
    %34 = arith.subf %29, %33 : vector<16x8xf32>
    %cst_15 = arith.constant 5.000000e-01 : f32
    %35 = vector.broadcast %cst_15 : f32 to vector<16x8xf32>
    %36 = arith.mulf %35, %15 : vector<16x8xf32>
    %cst_16 = arith.constant -1.000000e+00 : f32
    %cst_17 = arith.constant 1.000000e+00 : f32
    %37 = vector.broadcast %cst_16 : f32 to vector<16x8xf32>
    %38 = arith.maximumf %37, %15 : vector<16x8xf32>
    %39 = vector.broadcast %cst_17 : f32 to vector<16x8xf32>
    %40 = arith.minimumf %39, %38 : vector<16x8xf32>
    %41 = arith.subf %36, %40 : vector<16x8xf32>
    %cst_18 = arith.constant 5.000000e-01 : f32
    %42 = vector.broadcast %cst_18 : f32 to vector<16x8xf32>
    %43 = arith.mulf %42, %22 : vector<16x8xf32>
    %cst_19 = arith.constant -1.000000e+00 : f32
    %cst_20 = arith.constant 1.000000e+00 : f32
    %44 = vector.broadcast %cst_19 : f32 to vector<16x8xf32>
    %45 = arith.maximumf %44, %22 : vector<16x8xf32>
    %46 = vector.broadcast %cst_20 : f32 to vector<16x8xf32>
    %47 = arith.minimumf %46, %45 : vector<16x8xf32>
    %48 = arith.subf %43, %47 : vector<16x8xf32>
    %cst_21 = arith.constant 5.000000e-01 : f32
    %49 = vector.broadcast %cst_21 : f32 to vector<16x8xf32>
    %50 = arith.mulf %49, %27 : vector<16x8xf32>
    %cst_22 = arith.constant -1.000000e+00 : f32
    %cst_23 = arith.constant 1.000000e+00 : f32
    %51 = vector.broadcast %cst_22 : f32 to vector<16x8xf32>
    %52 = arith.maximumf %51, %27 : vector<16x8xf32>
    %53 = vector.broadcast %cst_23 : f32 to vector<16x8xf32>
    %54 = arith.minimumf %53, %52 : vector<16x8xf32>
    %55 = arith.subf %50, %54 : vector<16x8xf32>
    %56 = arith.subf %34, %41 : vector<16x8xf32>
    %57 = arith.subf %56, %48 : vector<16x8xf32>
    %58 = arith.addf %57, %55 : vector<16x8xf32>
    %c0_24 = arith.constant 0 : index
    %c0_25 = arith.constant 0 : index
    %59 = vector.load %arg5[%c0_24, %c0_25] : memref<16x8xf32, #tpu.memory_space<vmem>>, vector<16x8xf32>
    tpu.vector_store %arg5[%c0_24, %c0_25], %58 {strides = array<i32>} : memref<16x8xf32, #tpu.memory_space<vmem>>, vector<16x8xf32>,
    %60 = arith.subf %34, %41 : vector<16x8xf32>
    %61 = arith.addf %60, %48 : vector<16x8xf32>
    %62 = arith.subf %61, %55 : vector<16x8xf32>
    %c0_26 = arith.constant 0 : index
    %c0_27 = arith.constant 0 : index
    %63 = vector.load %arg6[%c0_26, %c0_27] : memref<16x8xf32, #tpu.memory_space<vmem>>, vector<16x8xf32>
    tpu.vector_store %arg6[%c0_26, %c0_27], %62 {strides = array<i32>} : memref<16x8xf32, #tpu.memory_space<vmem>>, vector<16x8xf32>,
    %64 = arith.addf %34, %41 : vector<16x8xf32>
    %65 = arith.subf %64, %48 : vector<16x8xf32>
    %66 = arith.subf %65, %55 : vector<16x8xf32>
    %c0_28 = arith.constant 0 : index
    %c0_29 = arith.constant 0 : index
    %67 = vector.load %arg7[%c0_28, %c0_29] : memref<16x8xf32, #tpu.memory_space<vmem>>, vector<16x8xf32>
    tpu.vector_store %arg7[%c0_28, %c0_29], %66 {strides = array<i32>} : memref<16x8xf32, #tpu.memory_space<vmem>>, vector<16x8xf32>,
    %68 = arith.addf %34, %41 : vector<16x8xf32>
    %69 = arith.addf %68, %48 : vector<16x8xf32>
    %70 = arith.addf %69, %55 : vector<16x8xf32>
    %c0_30 = arith.constant 0 : index
    %c0_31 = arith.constant 0 : index
    %71 = vector.load %arg8[%c0_30, %c0_31] : memref<16x8xf32, #tpu.memory_space<vmem>>, vector<16x8xf32>
    tpu.vector_store %arg8[%c0_30, %c0_31], %70 {strides = array<i32>} : memref<16x8xf32, #tpu.memory_space<vmem>>, vector<16x8xf32>,
    return
  }
  func.func @transform_0(%arg0: i32) -> (i32, i32) {
    %c0_i32 = arith.constant 0 : i32
    %c0_i32_0 = arith.constant 0 : i32
    return %arg0, %c0_i32 : i32, i32
  }
  func.func @transform_1(%arg0: i32) -> (i32, i32) {
    %c0_i32 = arith.constant 0 : i32
    %c0_i32_0 = arith.constant 0 : i32
    return %arg0, %c0_i32 : i32, i32
  }
  func.func @transform_2(%arg0: i32) -> (i32, i32) {
    %c0_i32 = arith.constant 0 : i32
    %c0_i32_0 = arith.constant 0 : i32
    return %arg0, %c0_i32 : i32, i32
  }
  func.func @transform_3(%arg0: i32) -> (i32, i32) {
    %c0_i32 = arith.constant 0 : i32
    %c0_i32_0 = arith.constant 0 : i32
    return %arg0, %c0_i32 : i32, i32
  }
  func.func @transform_4(%arg0: i32) -> (i32, i32) {
    %c0_i32 = arith.constant 0 : i32
    %c0_i32_0 = arith.constant 0 : i32
    return %arg0, %c0_i32 : i32, i32
  }
  func.func @transform_5(%arg0: i32) -> (i32, i32) {
    %c0_i32 = arith.constant 0 : i32
    %c0_i32_0 = arith.constant 0 : i32
    return %arg0, %c0_i32 : i32, i32
  }
  func.func @transform_6(%arg0: i32) -> (i32, i32) {
    %c0_i32 = arith.constant 0 : i32
    %c0_i32_0 = arith.constant 0 : i32
    return %arg0, %c0_i32 : i32, i32
  }
  func.func @transform_7(%arg0: i32) -> (i32, i32) {
    %c0_i32 = arith.constant 0 : i32
    %c0_i32_0 = arith.constant 0 : i32
    return %arg0, %c0_i32 : i32, i32
  }
}

module attributes {stable_mosaic.version = 11 : i64} {
  func.func @_matmul_kernel(%arg0: i32, %arg1: memref<27x27xf32, #tpu.memory_space<vmem>>, %arg2: memref<27x256xf32, #tpu.memory_space<vmem>>, %arg3: memref<27x256xf32, #tpu.memory_space<vmem>>) attributes {dimension_semantics = [#tpu.dimension_semantics<parallel>], iteration_bounds = array<i64: 1>, scalar_prefetch = 0 : i64, scratch_operands = 0 : i64, tpu.core_type = #tpu.core_type<tc>, window_params = [{pipeline_mode = #tpu.pipeline_mode<synchronous>, transform_indices = @transform_0, window_bounds = array<i64: 27, 27>}, {transform_indices = @transform_1, window_bounds = array<i64: 27, 256>}, {transform_indices = @transform_2, window_bounds = array<i64: 27, 256>}]} {
    %c0 = arith.constant 0 : index
    %c0_0 = arith.constant 0 : index
    %0 = vector.load %arg1[%c0, %c0_0] : memref<27x27xf32, #tpu.memory_space<vmem>>, vector<27x27xf32>
    %c0_1 = arith.constant 0 : index
    %c0_2 = arith.constant 0 : index
    %1 = vector.load %arg2[%c0_1, %c0_2] : memref<27x256xf32, #tpu.memory_space<vmem>>, vector<27x256xf32>
    %cst = arith.constant dense<0.000000e+00> : vector<27x256xf32>
    %2 = tpu.matmul %0, %1, %cst {dimension_numbers = #tpu.dot_dimension_numbers<[1], [0], [0], [1], [0, 0, 1, 1], [], []>} : vector<27x27xf32>, vector<27x256xf32>, vector<27x256xf32> -> vector<27x256xf32>
    %c0_3 = arith.constant 0 : index
    %c0_4 = arith.constant 0 : index
    %3 = vector.load %arg3[%c0_3, %c0_4] : memref<27x256xf32, #tpu.memory_space<vmem>>, vector<27x256xf32>
    tpu.vector_store %arg3[%c0_3, %c0_4], %2 {strides = array<i32>} : memref<27x256xf32, #tpu.memory_space<vmem>>, vector<27x256xf32>,
    return
  }
  func.func @transform_0(%arg0: i32) -> (i32, i32) {
    %c0_i32 = arith.constant 0 : i32
    %c0_i32_0 = arith.constant 0 : i32
    %c0_i32_1 = arith.constant 0 : i32
    return %c0_i32, %c0_i32_0 : i32, i32
  }
  func.func @transform_1(%arg0: i32) -> (i32, i32) {
    %c0_i32 = arith.constant 0 : i32
    %c0_i32_0 = arith.constant 0 : i32
    return %c0_i32, %arg0 : i32, i32
  }
  func.func @transform_2(%arg0: i32) -> (i32, i32) {
    %c0_i32 = arith.constant 0 : i32
    %c0_i32_0 = arith.constant 0 : i32
    return %c0_i32, %arg0 : i32, i32
  }
}

</mosaic_0001>

<llo_original>
// kernel: custom-call
$region0: #{custom-call}
  %s0 = inlined_call_operand.hbm [shape: c64[2,3,8,8], index: 0, kind: input, shape index: {}]
  %s1 = inlined_call_operand.vmem [shape: f32[2,3,8,8], index: 1, kind: output, shape index: {}]
  $region1: #{custom-call} parent=0
    #allocation0 [shape = 's32[1]{0}', space=sflag, size = 0x4, scoped, tag = 'scoped memory for custom-call']
    %2 = vsyncpa [#allocation0], 0
    %s3 = sshll.u32 %s1, 4
    %s4 = int_to_ptr.vmem [resolvable:$true] %s3
    %6 = dma.hbm_to_vmem [thread:$0]  %s0, 768, %s4, [#allocation0]
    %7 = dma.done [#allocation0], 768
    %8 = vsyncpa [#allocation0], 1

// kernel: custom-call.1
$region0: #{custom-call.1}
  %s0 = inlined_call_operand.hbm [shape: c64[2,3,8,8], index: 0, kind: input, shape index: {}]
  %s1 = inlined_call_operand.vmem [shape: f32[2,3,8,8], index: 1, kind: output, shape index: {}]
  %s2 = scalar_lea.hbm %s0, 768
  $region1: #{custom-call.1} parent=0
    #allocation0 [shape = 's32[1]{0}', space=sflag, size = 0x4, scoped, tag = 'scoped memory for custom-call.1']
    %3 = vsyncpa [#allocation0], 0
    %s4 = sshll.u32 %s1, 4
    %s5 = int_to_ptr.vmem [resolvable:$true] %s4
    %7 = dma.hbm_to_vmem [thread:$0]  %s2, 768, %s5, [#allocation0]
    %8 = dma.done [#allocation0], 768
    %9 = vsyncpa [#allocation0], 1

// kernel: sunit_forward.4
$region0: #{sunit_forward.4}
  #allocation0 [shape = 'u32[]', space=smem, size = 0x4, offset = 0x4, fixed_abs, tag = 'smem constant byte address 0x4 - core index']
  #allocation1 [shape = 'u32[144,128]{1,0:T(1,128)}', space=vmem, size = 0x12000, scoped, tag = 'internal scratch']
  %s0 = inlined_call_operand.vmem [shape: f32[27,3], index: 0, kind: input, shape index: {}]
  %s1 = inlined_call_operand.vmem [shape: f32[3,256], index: 1, kind: input, shape index: {}]
  %s2 = inlined_call_operand.vmem [shape: f32[27,256], index: 2, kind: output, shape index: {}]
  %s3 = sld [smem:[#allocation0]]
  $region18: #{sunit_forward.4} parent=0
    _
  %s5 = ssub.s32 1, %s3
  %s6 = scalar_select 0, %s5, %s3
  // Predicated region
  $region2: #{sunit_forward.4} parent=0 // pred_check
    _
  $region3: #{sunit_forward.4} parent=0 // pred_check_branch
    %8 = sbr.rel (0) target = $region5
  $region4: #{sunit_forward.4} parent=0 // pred_region
    _
  $region5: #{sunit_forward.4} parent=0 // pred_fallthru
    _
  // Predicated region
  $region6: #{sunit_forward.4} parent=0 // pred_check
    _
  $region7: #{sunit_forward.4} parent=0 // pred_check_branch
    %10 = sbr.rel (0) target = $region9
  $region8: #{sunit_forward.4} parent=0 // pred_region
    _
  $region9: #{sunit_forward.4} parent=0 // pred_fallthru
    _
  %v11 = vld [vmem:[%s0] sm:$0xff]
  %v12 = vld [vmem:[%s0 + $0x8] sm:$0xff]
  %v13 = vld [vmem:[%s0 + $0x10] sm:$0xff]
  %v14 = vld [vmem:[%s0 + $0x18] sm:$0x7]
  %v15 = vld [vmem:[%s1] sm:$0x77]
  %v17 = vcombine.high %v15, %v15
  %vm18 = vcmask 23552
  %v20 = vsel %vm18, %v11, 0
  %v23 = vsel %vm18, %v12, 0
  %v26 = vsel %vm18, %v13, 0
  %v29 = vsel %vm18, %v14, 0
  %vm31 = vcmask 1042432
  %v32 = vsel %vm31, %v15, 0
  %v34 = vsel %vm31, %v17, 0
  %36 = vmatprep.subr.mxu0 %v34
  %37 = vmatpush1.msra.mxu0 %v32
  %38 = vmatprep.subr.mxu0 0.0
  %39 = vmatpush1.msra.mxu0 0.0
  %40 = vmatprep.subr.mxu0 0.0
  %41 = vmatpush1.msra.mxu0 0.0
  %42 = vmatprep.subr.mxu0 0.0
  %43 = vmatpush1.msra.mxu0 0.0
  %44 = vmatprep.subr.mxu0 0.0
  %45 = vmatpush1.msra.mxu0 0.0
  %46 = vmatprep.subr.mxu0 0.0
  %47 = vmatpush1.msra.mxu0 0.0
  %48 = vmatprep.subr.mxu0 0.0
  %49 = vmatpush1.msra.mxu0 0.0
  %50 = vmatprep.subr.mxu0 0.0
  %51 = vmatpush1.msra.mxu0 0.0
  %52 = vmatprep.subr.mxu0 0.0
  %53 = vmatpush1.msra.mxu0 0.0
  %54 = vmatprep.subr.mxu0 0.0
  %55 = vmatpush1.msra.mxu0 0.0
  %56 = vmatprep.subr.mxu0 0.0
  %57 = vmatpush1.msra.mxu0 0.0
  %58 = vmatprep.subr.mxu0 0.0
  %59 = vmatpush1.msra.mxu0 0.0
  %60 = vmatprep.subr.mxu0 0.0
  %61 = vmatpush1.msra.mxu0 0.0
  %62 = vmatprep.subr.mxu0 0.0
  %63 = vmatpush1.msra.mxu0 0.0
  %64 = vmatprep.subr.mxu0 0.0
  %65 = vmatpush1.msra.mxu0 0.0
  %66 = vmatprep.subr.mxu0 0.0
  %67 = vmatpush1.msra.mxu0 0.0
  %68 = vmatprep.subr.mxu0 0.0
  %69 = vmatpush1.msra.mxu0 0.0
  %70 = vmatprep.subr.mxu0 0.0
  %71 = vmatpush1.msra.mxu0 0.0
  %72 = vmatprep.subr.mxu0 0.0
  %73 = vmatpush1.msra.mxu0 0.0
  %74 = vmatprep.subr.mxu0 0.0
  %75 = vmatpush1.msra.mxu0 0.0
  %76 = vmatprep.subr.mxu0 0.0
  %77 = vmatpush1.msra.mxu0 0.0
  %78 = vmatprep.subr.mxu0 0.0
  %79 = vmatpush1.msra.mxu0 0.0
  %80 = vmatprep.subr.mxu0 0.0
  %81 = vmatpush1.msra.mxu0 0.0
  %82 = vmatprep.subr.mxu0 0.0
  %83 = vmatpush1.msra.mxu0 0.0
  %84 = vmatprep.subr.mxu0 0.0
  %85 = vmatpush1.msra.mxu0 0.0
  %86 = vmatprep.subr.mxu0 0.0
  %87 = vmatpush1.msra.mxu0 0.0
  %88 = vmatprep.subr.mxu0 0.0
  %89 = vmatpush1.msra.mxu0 0.0
  %90 = vmatprep.subr.mxu0 0.0
  %91 = vmatpush1.msra.mxu0 0.0
  %92 = vmatprep.subr.mxu0 0.0
  %93 = vmatpush1.msra.mxu0 0.0
  %94 = vmatprep.subr.mxu0 0.0
  %95 = vmatpush1.msra.mxu0 0.0
  %96 = vmatprep.subr.mxu0 0.0
  %97 = vmatpush1.msra.mxu0 0.0
  %98 = vmatprep.subr.mxu0 0.0
  %99 = vmatpush1.msra.mxu0 0.0
  %100 = vmatprep.mubr.f32.mxu0 0.0
  %101 = vmatmul.mubr.f32.gmra.mrb[0].mxu0 %v20
  %v102 = vpop.f32.mrb[0].mxu0
  %v103 = vadd.f32 0.0, %v102
  %v104 = vpop.f32.mrb[0].mxu0
  %v105 = vadd.f32 0.0, %v104
  %106 = vmatprep.mubr.f32.mxu0 0.0
  %107 = vmatmul.mubr.f32.gmra.mrb[0].mxu0 %v23
  %v108 = vpop.f32.mrb[0].mxu0
  %v109 = vadd.f32 0.0, %v108
  %v110 = vpop.f32.mrb[0].mxu0
  %v111 = vadd.f32 0.0, %v110
  %112 = vmatprep.mubr.f32.mxu0 0.0
  %113 = vmatmul.mubr.f32.gmra.mrb[0].mxu0 %v26
  %v114 = vpop.f32.mrb[0].mxu0
  %v115 = vadd.f32 0.0, %v114
  %v116 = vpop.f32.mrb[0].mxu0
  %v117 = vadd.f32 0.0, %v116
  %118 = vmatprep.mubr.f32.mxu0 0.0
  %119 = vmatmul.mubr.f32.gmra.mrb[0].mxu0 %v29
  %v120 = vpop.f32.mrb[0].mxu0
  %v121 = vadd.f32 0.0, %v120
  %v122 = vpop.f32.mrb[0].mxu0
  %v123 = vadd.f32 0.0, %v122
  %124 = vdwg.mxu0
  %125 = vst [vmem:[%s2] sm:$0xff] %v103
  %126 = vst [vmem:[%s2 + $0x8] sm:$0xff] %v105
  %127 = vst [vmem:[%s2 + $0x10] sm:$0xff] %v109
  %128 = vst [vmem:[%s2 + $0x18] sm:$0xff] %v111
  %129 = vst [vmem:[%s2 + $0x20] sm:$0xff] %v115
  %130 = vst [vmem:[%s2 + $0x28] sm:$0xff] %v117
  %131 = vst [vmem:[%s2 + $0x30] sm:$0x7] %v121
  %132 = vst [vmem:[%s2 + $0x38] sm:$0x7] %v123
  // Predicated region
  $region10: #{sunit_forward.4} parent=0 // pred_check
    _
  $region11: #{sunit_forward.4} parent=0 // pred_check_branch
    %134 = sbr.rel (0) target = $region13
  $region12: #{sunit_forward.4} parent=0 // pred_region
    _
  $region13: #{sunit_forward.4} parent=0 // pred_fallthru
    _
  // Predicated region
  $region14: #{sunit_forward.4} parent=0 // pred_check
    _
  $region15: #{sunit_forward.4} parent=0 // pred_check_branch
    %136 = sbr.rel (0) target = $region17
  $region16: #{sunit_forward.4} parent=0 // pred_region
    _
  $region17: #{sunit_forward.4} parent=0 // pred_fallthru
    _

// kernel: sunit_forward.3
$region0: #{sunit_forward.3}
  #allocation0 [shape = 'u32[]', space=smem, size = 0x4, offset = 0x4, fixed_abs, tag = 'smem constant byte address 0x4 - core index']
  #allocation1 [shape = 'u32[144,128]{1,0:T(1,128)}', space=vmem, size = 0x12000, scoped, tag = 'internal scratch']
  %s0 = inlined_call_operand.vmem [shape: f32[48,8], index: 0, kind: input, shape index: {}]
  %s1 = inlined_call_operand.vmem [shape: f32[48,8], index: 1, kind: input, shape index: {}]
  %s2 = inlined_call_operand.vmem [shape: f32[48,8], index: 2, kind: input, shape index: {}]
  %s3 = inlined_call_operand.vmem [shape: f32[48,8], index: 3, kind: input, shape index: {}]
  %s4 = inlined_call_operand.vmem [shape: f32[48,8], index: 4, kind: output, shape index: {0}]
  %s5 = inlined_call_operand.vmem [shape: f32[48,8], index: 5, kind: output, shape index: {1}]
  %s6 = inlined_call_operand.vmem [shape: f32[48,8], index: 6, kind: output, shape index: {2}]
  %s7 = inlined_call_operand.vmem [shape: f32[48,8], index: 7, kind: output, shape index: {3}]
  %8 = xla_tuple %s4, %s5, %s6, %s7
  %s9 = sld [smem:[#allocation0]]
  $region73: #{sunit_forward.3} parent=0
    _
  %s11 = ssub.s32 1, %s9
  %s12 = scalar_select 0, %s11, %s9
  loop: start=0, step=1, limit=5
  $region2: #{sunit_forward.3} parent=0 // loop_pre_header
    _
  $region3: #{sunit_forward.3} parent=0 // loop_header
    %s14 = sphi 0, %s18
    %p15 = scmp.ge.s32.totalorder %s14, 5
    %s24 = sphi 0, %s26
    %s27 = sphi 0, %s24
    %s28 = sphi 0, %s27
    %s44 = sphi 0, %s28
    %s50 = sphi 0, %s52
    %s53 = sphi 0, %s50
    %s54 = sphi 0, %s53
    %s70 = sphi 0, %s54
    %s76 = sphi 0, %s78
    %s79 = sphi 0, %s76
    %s80 = sphi 0, %s79
    %s96 = sphi 0, %s80
    %s102 = sphi 0, %s104
    %s105 = sphi 0, %s102
    %s106 = sphi 0, %s105
    %s122 = sphi 0, %s106
    %s128 = sphi 0, %s130
    %s131 = sphi 0, %s128
    %s132 = sphi 0, %s131
    %s148 = sphi 0, %s132
    %s154 = sphi 0, %s156
    %s157 = sphi 0, %s154
    %s158 = sphi 0, %s157
    %s174 = sphi 0, %s158
    %s180 = sphi 0, %s182
    %s183 = sphi 0, %s180
    %s184 = sphi 0, %s183
    %s200 = sphi 0, %s184
    %s206 = sphi 0, %s208
    %s209 = sphi 0, %s206
    %s210 = sphi 0, %s209
    %s226 = sphi 0, %s210
  $region4: #{sunit_forward.3} parent=0 // loop_header_branch
    %17 = sbr.rel (%p15) target = $region8
  $region5: #{sunit_forward.3} parent=0 // loop_body
    %s19 = ssub.s32 %s14, 1
    %s20 = ssub.s32 %s14, 2
    %s21 = sadd.s32 %s14, 1
    %s22 = ssub.s32 %s14, %s21
    %p23 = scmp.eq.s32.totalorder %s22, 0
    %s25 = sadd.s32 %s24, 1
    %s26 = scalar_select %p23, %s24, %s25
    %p29 = pneg %p23
    %p30 = scmp.eq.s32.totalorder %s14, 2
    %p31 = por %p29, %p30
    %p32 = scmp.ne.s32.totalorder %s24, %s27
    %p33 = scmp.eq.s32.totalorder %s14, 0
    %p34 = por %p32, %p33
    %p35 = scmp.ne.s32.totalorder %s24, %s27
    %p36 = scmp.eq.s32.totalorder %s19, 2
    %p37 = por %p35, %p36
    %p38 = scmp.ne.s32.totalorder %s27, %s28
    %p39 = scmp.eq.s32.totalorder %s19, 0
    %p40 = por %p38, %p39
    %p41 = scmp.ne.s32.totalorder %s27, %s28
    %p42 = scmp.eq.s32.totalorder %s20, 2
    %p43 = por %p41, %p42
    %p45 = scmp.ne.s32.totalorder %s28, %s44
    %p46 = scmp.eq.s32.totalorder %s20, 0
    %p47 = por %p45, %p46
    %s48 = ssub.s32 %s14, %s21
    %p49 = scmp.eq.s32.totalorder %s48, 0
    %s51 = sadd.s32 %s50, 1
    %s52 = scalar_select %p49, %s50, %s51
    %p55 = pneg %p49
    %p56 = scmp.eq.s32.totalorder %s14, 2
    %p57 = por %p55, %p56
    %p58 = scmp.ne.s32.totalorder %s50, %s53
    %p59 = scmp.eq.s32.totalorder %s14, 0
    %p60 = por %p58, %p59
    %p61 = scmp.ne.s32.totalorder %s50, %s53
    %p62 = scmp.eq.s32.totalorder %s19, 2
    %p63 = por %p61, %p62
    %p64 = scmp.ne.s32.totalorder %s53, %s54
    %p65 = scmp.eq.s32.totalorder %s19, 0
    %p66 = por %p64, %p65
    %p67 = scmp.ne.s32.totalorder %s53, %s54
    %p68 = scmp.eq.s32.totalorder %s20, 2
    %p69 = por %p67, %p68
    %p71 = scmp.ne.s32.totalorder %s54, %s70
    %p72 = scmp.eq.s32.totalorder %s20, 0
    %p73 = por %p71, %p72
    %s74 = ssub.s32 %s14, %s21
    %p75 = scmp.eq.s32.totalorder %s74, 0
    %s77 = sadd.s32 %s76, 1
    %s78 = scalar_select %p75, %s76, %s77
    %p81 = pneg %p75
    %p82 = scmp.eq.s32.totalorder %s14, 2
    %p83 = por %p81, %p82
    %p84 = scmp.ne.s32.totalorder %s76, %s79
    %p85 = scmp.eq.s32.totalorder %s14, 0
    %p86 = por %p84, %p85
    %p87 = scmp.ne.s32.totalorder %s76, %s79
    %p88 = scmp.eq.s32.totalorder %s19, 2
    %p89 = por %p87, %p88
    %p90 = scmp.ne.s32.totalorder %s79, %s80
    %p91 = scmp.eq.s32.totalorder %s19, 0
    %p92 = por %p90, %p91
    %p93 = scmp.ne.s32.totalorder %s79, %s80
    %p94 = scmp.eq.s32.totalorder %s20, 2
    %p95 = por %p93, %p94
    %p97 = scmp.ne.s32.totalorder %s80, %s96
    %p98 = scmp.eq.s32.totalorder %s20, 0
    %p99 = por %p97, %p98
    %s100 = ssub.s32 %s14, %s21
    %p101 = scmp.eq.s32.totalorder %s100, 0
    %s103 = sadd.s32 %s102, 1
    %s104 = scalar_select %p101, %s102, %s103
    %p107 = pneg %p101
    %p108 = scmp.eq.s32.totalorder %s14, 2
    %p109 = por %p107, %p108
    %p110 = scmp.ne.s32.totalorder %s102, %s105
    %p111 = scmp.eq.s32.totalorder %s14, 0
    %p112 = por %p110, %p111
    %p113 = scmp.ne.s32.totalorder %s102, %s105
    %p114 = scmp.eq.s32.totalorder %s19, 2
    %p115 = por %p113, %p114
    %p116 = scmp.ne.s32.totalorder %s105, %s106
    %p117 = scmp.eq.s32.totalorder %s19, 0
    %p118 = por %p116, %p117
    %p119 = scmp.ne.s32.totalorder %s105, %s106
    %p120 = scmp.eq.s32.totalorder %s20, 2
    %p121 = por %p119, %p120
    %p123 = scmp.ne.s32.totalorder %s106, %s122
    %p124 = scmp.eq.s32.totalorder %s20, 0
    %p125 = por %p123, %p124
    %s126 = ssub.s32 %s14, %s21
    %p127 = scmp.eq.s32.totalorder %s126, 0
    %s129 = sadd.s32 %s128, 1
    %s130 = scalar_select %p127, %s128, %s129
    %p133 = pneg %p127
    %p134 = scmp.eq.s32.totalorder %s14, 2
    %p135 = por %p133, %p134
    %p136 = scmp.ne.s32.totalorder %s128, %s131
    %p137 = scmp.eq.s32.totalorder %s14, 0
    %p138 = por %p136, %p137
    %p139 = scmp.ne.s32.totalorder %s128, %s131
    %p140 = scmp.eq.s32.totalorder %s19, 2
    %p141 = por %p139, %p140
    %p142 = scmp.ne.s32.totalorder %s131, %s132
    %p143 = scmp.eq.s32.totalorder %s19, 0
    %p144 = por %p142, %p143
    %p145 = scmp.ne.s32.totalorder %s131, %s132
    %p146 = scmp.eq.s32.totalorder %s20, 2
    %p147 = por %p145, %p146
    %p149 = scmp.ne.s32.totalorder %s132, %s148
    %p150 = scmp.eq.s32.totalorder %s20, 0
    %p151 = por %p149, %p150
    %s152 = ssub.s32 %s14, %s21
    %p153 = scmp.eq.s32.totalorder %s152, 0
    %s155 = sadd.s32 %s154, 1
    %s156 = scalar_select %p153, %s154, %s155
    %p159 = pneg %p153
    %p160 = scmp.eq.s32.totalorder %s14, 2
    %p161 = por %p159, %p160
    %p162 = scmp.ne.s32.totalorder %s154, %s157
    %p163 = scmp.eq.s32.totalorder %s14, 0
    %p164 = por %p162, %p163
    %p165 = scmp.ne.s32.totalorder %s154, %s157
    %p166 = scmp.eq.s32.totalorder %s19, 2
    %p167 = por %p165, %p166
    %p168 = scmp.ne.s32.totalorder %s157, %s158
    %p169 = scmp.eq.s32.totalorder %s19, 0
    %p170 = por %p168, %p169
    %p171 = scmp.ne.s32.totalorder %s157, %s158
    %p172 = scmp.eq.s32.totalorder %s20, 2
    %p173 = por %p171, %p172
    %p175 = scmp.ne.s32.totalorder %s158, %s174
    %p176 = scmp.eq.s32.totalorder %s20, 0
    %p177 = por %p175, %p176
    %s178 = ssub.s32 %s14, %s21
    %p179 = scmp.eq.s32.totalorder %s178, 0
    %s181 = sadd.s32 %s180, 1
    %s182 = scalar_select %p179, %s180, %s181
    %p185 = pneg %p179
    %p186 = scmp.eq.s32.totalorder %s14, 2
    %p187 = por %p185, %p186
    %p188 = scmp.ne.s32.totalorder %s180, %s183
    %p189 = scmp.eq.s32.totalorder %s14, 0
    %p190 = por %p188, %p189
    %p191 = scmp.ne.s32.totalorder %s180, %s183
    %p192 = scmp.eq.s32.totalorder %s19, 2
    %p193 = por %p191, %p192
    %p194 = scmp.ne.s32.totalorder %s183, %s184
    %p195 = scmp.eq.s32.totalorder %s19, 0
    %p196 = por %p194, %p195
    %p197 = scmp.ne.s32.totalorder %s183, %s184
    %p198 = scmp.eq.s32.totalorder %s20, 2
    %p199 = por %p197, %p198
    %p201 = scmp.ne.s32.totalorder %s184, %s200
    %p202 = scmp.eq.s32.totalorder %s20, 0
    %p203 = por %p201, %p202
    %s204 = ssub.s32 %s14, %s21
    %p205 = scmp.eq.s32.totalorder %s204, 0
    %s207 = sadd.s32 %s206, 1
    %s208 = scalar_select %p205, %s206, %s207
    %p211 = pneg %p205
    %p212 = scmp.eq.s32.totalorder %s14, 2
    %p213 = por %p211, %p212
    %p214 = scmp.ne.s32.totalorder %s206, %s209
    %p215 = scmp.eq.s32.totalorder %s14, 0
    %p216 = por %p214, %p215
    %p217 = scmp.ne.s32.totalorder %s206, %s209
    %p218 = scmp.eq.s32.totalorder %s19, 2
    %p219 = por %p217, %p218
    %p220 = scmp.ne.s32.totalorder %s209, %s210
    %p221 = scmp.eq.s32.totalorder %s19, 0
    %p222 = por %p220, %p221
    %p223 = scmp.ne.s32.totalorder %s209, %s210
    %p224 = scmp.eq.s32.totalorder %s20, 2
    %p225 = por %p223, %p224
    %p227 = scmp.ne.s32.totalorder %s210, %s226
    %p228 = scmp.eq.s32.totalorder %s20, 0
    %p229 = por %p227, %p228
    %p230 = scmp.le.s32.totalorder 1, %s14
    %p231 = scmp.lt.s32.totalorder %s14, 4
    %p232 = pnand %p230, %p231
    %p233 = pneg %p232
    // Predicated region
    $region9: #{sunit_forward.3} parent=5 // pred_check
      _
    $region10: #{sunit_forward.3} parent=5 // pred_check_branch
      %235 = sbr.rel (%p232) target = $region12
    $region11: #{sunit_forward.3} parent=5 // pred_region
      %s236 = ssub.s32 %s14, 1
    $region12: #{sunit_forward.3} parent=5 // pred_fallthru
      _
    %p237 = scmp.lt.s32.totalorder %s14, 3
    // Predicated region
    $region13: #{sunit_forward.3} parent=5 // pred_check
      %p238 = pneg %p237
    $region14: #{sunit_forward.3} parent=5 // pred_check_branch
      %240 = sbr.rel (%p238) target = $region16
    $region15: #{sunit_forward.3} parent=5 // pred_region
      // Predicated region
      $region17: #{sunit_forward.3} parent=15 // pred_check
        %p241 = pneg %p34
      $region18: #{sunit_forward.3} parent=15 // pred_check_branch
        %243 = sbr.rel (%p241) target = $region20
      $region19: #{sunit_forward.3} parent=15 // pred_region
        %s244 = smul.u32 2, %s14
        %p245 = scmp.lt.s32.totalorder %s244, 5
        %s246 = scalar_select %p245, %s244, 5
        %s247 = smul.addr %s246, 8
        %s248 = scalar_lea.vmem %s0, %s247
        %s249 = smul.u32 2, %s14
      $region20: #{sunit_forward.3} parent=15 // pred_fallthru
        _
      // Predicated region
      $region21: #{sunit_forward.3} parent=15 // pred_check
        %p250 = pneg %p60
      $region22: #{sunit_forward.3} parent=15 // pred_check_branch
        %252 = sbr.rel (%p250) target = $region24
      $region23: #{sunit_forward.3} parent=15 // pred_region
        %s253 = smul.u32 2, %s14
        %p254 = scmp.lt.s32.totalorder %s253, 5
        %s255 = scalar_select %p254, %s253, 5
        %s256 = smul.addr %s255, 8
        %s257 = scalar_lea.vmem %s1, %s256
        %s258 = smul.u32 2, %s14
      $region24: #{sunit_forward.3} parent=15 // pred_fallthru
        _
      // Predicated region
      $region25: #{sunit_forward.3} parent=15 // pred_check
        %p259 = pneg %p86
      $region26: #{sunit_forward.3} parent=15 // pred_check_branch
        %261 = sbr.rel (%p259) target = $region28
      $region27: #{sunit_forward.3} parent=15 // pred_region
        %s262 = smul.u32 2, %s14
        %p263 = scmp.lt.s32.totalorder %s262, 5
        %s264 = scalar_select %p263, %s262, 5
        %s265 = smul.addr %s264, 8
        %s266 = scalar_lea.vmem %s2, %s265
        %s267 = smul.u32 2, %s14
      $region28: #{sunit_forward.3} parent=15 // pred_fallthru
        _
      // Predicated region
      $region29: #{sunit_forward.3} parent=15 // pred_check
        %p268 = pneg %p112
      $region30: #{sunit_forward.3} parent=15 // pred_check_branch
        %270 = sbr.rel (%p268) target = $region32
      $region31: #{sunit_forward.3} parent=15 // pred_region
        %s271 = smul.u32 2, %s14
        %p272 = scmp.lt.s32.totalorder %s271, 5
        %s273 = scalar_select %p272, %s271, 5
        %s274 = smul.addr %s273, 8
        %s275 = scalar_lea.vmem %s3, %s274
        %s276 = smul.u32 2, %s14
      $region32: #{sunit_forward.3} parent=15 // pred_fallthru
        _
    $region16: #{sunit_forward.3} parent=5 // pred_fallthru
      _
    %p277 = scmp.le.s32.totalorder 1, %s14
    %p278 = scmp.lt.s32.totalorder %s14, 4
    %p279 = pnand %p277, %p278
    %p280 = pneg %p279
    // Predicated region
    $region33: #{sunit_forward.3} parent=5 // pred_check
      _
    $region34: #{sunit_forward.3} parent=5 // pred_check_branch
      %282 = sbr.rel (%p279) target = $region36
    $region35: #{sunit_forward.3} parent=5 // pred_region
      %s283 = ssub.s32 %s14, 1
      %s284 = smul.u32 2, %s19
      %p285 = scmp.lt.s32.totalorder %s284, 5
      %s286 = scalar_select %p285, %s284, 5
      %s287 = smul.addr %s286, 8
      %s288 = scalar_lea.vmem %s0, %s287
      %p289 = pneg %p40
      %p290 = pneg %p37
      %s291 = smul.u32 2, %s19
      %p292 = scmp.lt.s32.totalorder %s291, 5
      %s293 = scalar_select %p292, %s291, 5
      %s294 = smul.addr %s293, 8
      %s295 = scalar_lea.vmem %s1, %s294
      %p296 = pneg %p66
      %p297 = pneg %p63
      %s298 = smul.u32 2, %s19
      %p299 = scmp.lt.s32.totalorder %s298, 5
      %s300 = scalar_select %p299, %s298, 5
      %s301 = smul.addr %s300, 8
      %s302 = scalar_lea.vmem %s2, %s301
      %p303 = pneg %p92
      %p304 = pneg %p89
      %s305 = smul.u32 2, %s19
      %p306 = scmp.lt.s32.totalorder %s305, 5
      %s307 = scalar_select %p306, %s305, 5
      %s308 = smul.addr %s307, 8
      %s309 = scalar_lea.vmem %s3, %s308
      %p310 = pneg %p118
      %p311 = pneg %p115
      %p312 = pneg %p144
      %p313 = pneg %p141
      %s314 = smul.u32 2, %s19
      %p315 = scmp.lt.s32.totalorder %s314, 5
      %s316 = scalar_select %p315, %s314, 5
      %s317 = smul.addr %s316, 8
      %s318 = scalar_lea.vmem %s4, %s317
      %p319 = pneg %p170
      %p320 = pneg %p167
      %s321 = smul.u32 2, %s19
      %p322 = scmp.lt.s32.totalorder %s321, 5
      %s323 = scalar_select %p322, %s321, 5
      %s324 = smul.addr %s323, 8
      %s325 = scalar_lea.vmem %s5, %s324
      %p326 = pneg %p196
      %p327 = pneg %p193
      %s328 = smul.u32 2, %s19
      %p329 = scmp.lt.s32.totalorder %s328, 5
      %s330 = scalar_select %p329, %s328, 5
      %s331 = smul.addr %s330, 8
      %s332 = scalar_lea.vmem %s6, %s331
      %p333 = pneg %p222
      %p334 = pneg %p219
      %s335 = smul.u32 2, %s19
      %p336 = scmp.lt.s32.totalorder %s335, 5
      %s337 = scalar_select %p336, %s335, 5
      %s338 = smul.addr %s337, 8
      %s339 = scalar_lea.vmem %s7, %s338
      %s340 = smul.u32 2, %s19
      %p341 = scmp.lt.s32.totalorder %s340, 5
      %s342 = scalar_select %p341, %s340, 5
      %s343 = smul.addr %s342, 8
      %s344 = scalar_lea.vmem %s0, %s343
      %s345 = smul.u32 2, %s19
      %s346 = smul.u32 2, %s19
      %p347 = scmp.lt.s32.totalorder %s346, 5
      %s348 = scalar_select %p347, %s346, 5
      %s349 = smul.addr %s348, 8
      %s350 = scalar_lea.vmem %s1, %s349
      %s351 = smul.u32 2, %s19
      %s352 = smul.u32 2, %s19
      %p353 = scmp.lt.s32.totalorder %s352, 5
      %s354 = scalar_select %p353, %s352, 5
      %s355 = smul.addr %s354, 8
      %s356 = scalar_lea.vmem %s2, %s355
      %s357 = smul.u32 2, %s19
      %s358 = smul.u32 2, %s19
      %p359 = scmp.lt.s32.totalorder %s358, 5
      %s360 = scalar_select %p359, %s358, 5
      %s361 = smul.addr %s360, 8
      %s362 = scalar_lea.vmem %s3, %s361
      %s363 = smul.u32 2, %s19
      %s364 = smul.u32 2, %s19
      %p365 = scmp.lt.s32.totalorder %s364, 5
      %s366 = scalar_select %p365, %s364, 5
      %s367 = smul.addr %s366, 8
      %s368 = scalar_lea.vmem %s4, %s367
      %s369 = smul.u32 2, %s19
      %s370 = smul.u32 2, %s19
      %p371 = scmp.lt.s32.totalorder %s370, 5
      %s372 = scalar_select %p371, %s370, 5
      %s373 = smul.addr %s372, 8
      %s374 = scalar_lea.vmem %s5, %s373
      %s375 = smul.u32 2, %s19
      %s376 = smul.u32 2, %s19
      %p377 = scmp.lt.s32.totalorder %s376, 5
      %s378 = scalar_select %p377, %s376, 5
      %s379 = smul.addr %s378, 8
      %s380 = scalar_lea.vmem %s6, %s379
      %s381 = smul.u32 2, %s19
      %s382 = smul.u32 2, %s19
      %p383 = scmp.lt.s32.totalorder %s382, 5
      %s384 = scalar_select %p383, %s382, 5
      %s385 = smul.addr %s384, 8
      %s386 = scalar_lea.vmem %s7, %s385
      %s387 = smul.u32 2, %s19
      %v388 = vld [vmem:[%s344] sm:$0xff]
      %v389 = vld [vmem:[%s344 + $0x8] sm:$0xff]
      %v390 = vld [vmem:[%s350] sm:$0xff]
      %v391 = vld [vmem:[%s350 + $0x8] sm:$0xff]
      %v392 = vld [vmem:[%s356] sm:$0xff]
      %v393 = vld [vmem:[%s356 + $0x8] sm:$0xff]
      %v394 = vld [vmem:[%s362] sm:$0xff]
      %v395 = vld [vmem:[%s362 + $0x8] sm:$0xff]
      %v396 = vadd.f32 %v388, %v390
      %v397 = vadd.f32 %v389, %v391
      %v398 = vadd.f32 %v396, %v392
      %v399 = vadd.f32 %v397, %v393
      %v400 = vadd.f32 %v398, %v394
      %v401 = vadd.f32 %v399, %v395
      %v402 = vmul.f32 %v400, 0.5
      %v403 = vmul.f32 %v401, 0.5
      %v404 = vsub.f32 0.0, %v388
      %v405 = vsub.f32 0.0, %v389
      %v406 = vsub.f32 %v404, %v390
      %v407 = vsub.f32 %v405, %v391
      %v408 = vadd.f32 %v406, %v392
      %v409 = vadd.f32 %v407, %v393
      %v410 = vadd.f32 %v408, %v394
      %v411 = vadd.f32 %v409, %v395
      %v412 = vmul.f32 %v410, 0.5
      %v413 = vmul.f32 %v411, 0.5
      %v414 = vadd.f32 %v404, %v390
      %v415 = vadd.f32 %v405, %v391
      %v416 = vsub.f32 %v414, %v392
      %v417 = vsub.f32 %v415, %v393
      %v418 = vadd.f32 %v416, %v394
      %v419 = vadd.f32 %v417, %v395
      %v420 = vmul.f32 %v418, 0.5
      %v421 = vmul.f32 %v419, 0.5
      %v422 = vsub.f32 %v388, %v390
      %v423 = vsub.f32 %v389, %v391
      %v424 = vsub.f32 %v422, %v392
      %v425 = vsub.f32 %v423, %v393
      %v426 = vadd.f32 %v424, %v394
      %v427 = vadd.f32 %v425, %v395
      %v428 = vmul.f32 %v426, 0.5
      %v429 = vmul.f32 %v427, 0.5
      %v430 = vmul.f32 %v402, 0.5
      %v431 = vmul.f32 %v403, 0.5
      %v432 = vmax.f32 %v402, -1.0
      %v433 = vmax.f32 %v403, -1.0
      %v434 = vmin.f32 %v432, 1.0
      %v435 = vmin.f32 %v433, 1.0
      %v436 = vsub.f32 %v430, %v434
      %v437 = vsub.f32 %v431, %v435
      %v438 = vmul.f32 %v412, 0.5
      %v439 = vmul.f32 %v413, 0.5
      %v440 = vmax.f32 %v412, -1.0
      %v441 = vmax.f32 %v413, -1.0
      %v442 = vmin.f32 %v440, 1.0
      %v443 = vmin.f32 %v441, 1.0
      %v444 = vsub.f32 %v438, %v442
      %v445 = vsub.f32 %v439, %v443
      %v446 = vmul.f32 %v420, 0.5
      %v447 = vmul.f32 %v421, 0.5
      %v448 = vmax.f32 %v420, -1.0
      %v449 = vmax.f32 %v421, -1.0
      %v450 = vmin.f32 %v448, 1.0
      %v451 = vmin.f32 %v449, 1.0
      %v452 = vsub.f32 %v446, %v450
      %v453 = vsub.f32 %v447, %v451
      %v454 = vmul.f32 %v428, 0.5
      %v455 = vmul.f32 %v429, 0.5
      %v456 = vmax.f32 %v428, -1.0
      %v457 = vmax.f32 %v429, -1.0
      %v458 = vmin.f32 %v456, 1.0
      %v459 = vmin.f32 %v457, 1.0
      %v460 = vsub.f32 %v454, %v458
      %v461 = vsub.f32 %v455, %v459
      %v462 = vsub.f32 %v436, %v444
      %v463 = vsub.f32 %v437, %v445
      %v464 = vsub.f32 %v462, %v452
      %v465 = vsub.f32 %v463, %v453
      %v466 = vadd.f32 %v464, %v460
      %v467 = vadd.f32 %v465, %v461
      %vm468 = vcmask 64512
      %469 = vst.msk [vmem:[%s368] sm:$0xff] %vm468, %v466
      %470 = vst.msk [vmem:[%s368 + $0x8] sm:$0xff] %vm468, %v467
      %v471 = vadd.f32 %v462, %v452
      %v472 = vadd.f32 %v463, %v453
      %v473 = vsub.f32 %v471, %v460
      %v474 = vsub.f32 %v472, %v461
      %475 = vst.msk [vmem:[%s374] sm:$0xff] %vm468, %v473
      %476 = vst.msk [vmem:[%s374 + $0x8] sm:$0xff] %vm468, %v474
      %v477 = vadd.f32 %v436, %v444
      %v478 = vadd.f32 %v437, %v445
      %v479 = vsub.f32 %v477, %v452
      %v480 = vsub.f32 %v478, %v453
      %v481 = vsub.f32 %v479, %v460
      %v482 = vsub.f32 %v480, %v461
      %483 = vst.msk [vmem:[%s380] sm:$0xff] %vm468, %v481
      %484 = vst.msk [vmem:[%s380 + $0x8] sm:$0xff] %vm468, %v482
      %v485 = vadd.f32 %v477, %v452
      %v486 = vadd.f32 %v478, %v453
      %v487 = vadd.f32 %v485, %v460
      %v488 = vadd.f32 %v486, %v461
      %489 = vst.msk [vmem:[%s386] sm:$0xff] %vm468, %v487
      %490 = vst.msk [vmem:[%s386 + $0x8] sm:$0xff] %vm468, %v488
      %s491 = smul.u32 2, %s19
      %p492 = scmp.lt.s32.totalorder %s491, 5
      %s493 = scalar_select %p492, %s491, 5
      %s494 = smul.addr %s493, 8
      %s495 = scalar_lea.vmem %s4, %s494
      %s496 = smul.u32 2, %s19
      %p497 = scmp.lt.s32.totalorder %s496, 5
      %s498 = scalar_select %p497, %s496, 5
      %s499 = smul.addr %s498, 8
      %s500 = scalar_lea.vmem %s5, %s499
      %s501 = smul.u32 2, %s19
      %p502 = scmp.lt.s32.totalorder %s501, 5
      %s503 = scalar_select %p502, %s501, 5
      %s504 = smul.addr %s503, 8
      %s505 = scalar_lea.vmem %s6, %s504
      %s506 = smul.u32 2, %s19
      %p507 = scmp.lt.s32.totalorder %s506, 5
      %s508 = scalar_select %p507, %s506, 5
      %s509 = smul.addr %s508, 8
      %s510 = scalar_lea.vmem %s7, %s509
      // Predicated region
      $region37: #{sunit_forward.3} parent=35 // pred_check
        %p511 = pneg %p141
      $region38: #{sunit_forward.3} parent=35 // pred_check_branch
        %513 = sbr.rel (%p511) target = $region40
      $region39: #{sunit_forward.3} parent=35 // pred_region
        %s514 = smul.u32 2, %s19
      $region40: #{sunit_forward.3} parent=35 // pred_fallthru
        _
      // Predicated region
      $region41: #{sunit_forward.3} parent=35 // pred_check
        %p515 = pneg %p167
      $region42: #{sunit_forward.3} parent=35 // pred_check_branch
        %517 = sbr.rel (%p515) target = $region44
      $region43: #{sunit_forward.3} parent=35 // pred_region
        %s518 = smul.u32 2, %s19
      $region44: #{sunit_forward.3} parent=35 // pred_fallthru
        _
      // Predicated region
      $region45: #{sunit_forward.3} parent=35 // pred_check
        %p519 = pneg %p193
      $region46: #{sunit_forward.3} parent=35 // pred_check_branch
        %521 = sbr.rel (%p519) target = $region48
      $region47: #{sunit_forward.3} parent=35 // pred_region
        %s522 = smul.u32 2, %s19
      $region48: #{sunit_forward.3} parent=35 // pred_fallthru
        _
      // Predicated region
      $region49: #{sunit_forward.3} parent=35 // pred_check
        %p523 = pneg %p219
      $region50: #{sunit_forward.3} parent=35 // pred_check_branch
        %525 = sbr.rel (%p523) target = $region52
      $region51: #{sunit_forward.3} parent=35 // pred_region
        %s526 = smul.u32 2, %s19
      $region52: #{sunit_forward.3} parent=35 // pred_fallthru
        _
    $region36: #{sunit_forward.3} parent=5 // pred_fallthru
      _
    %p527 = scmp.le.s32.totalorder 2, %s14
    // Predicated region
    $region53: #{sunit_forward.3} parent=5 // pred_check
      %p528 = pneg %p527
    $region54: #{sunit_forward.3} parent=5 // pred_check_branch
      %530 = sbr.rel (%p528) target = $region56
    $region55: #{sunit_forward.3} parent=5 // pred_region
      %s531 = ssub.s32 %s14, 2
      // Predicated region
      $region57: #{sunit_forward.3} parent=55 // pred_check
        %p532 = pneg %p147
      $region58: #{sunit_forward.3} parent=55 // pred_check_branch
        %534 = sbr.rel (%p532) target = $region60
      $region59: #{sunit_forward.3} parent=55 // pred_region
        %s535 = smul.u32 2, %s20
        %p536 = scmp.lt.s32.totalorder %s535, 5
        %s537 = scalar_select %p536, %s535, 5
        %s538 = smul.addr %s537, 8
        %s539 = scalar_lea.vmem %s4, %s538
      $region60: #{sunit_forward.3} parent=55 // pred_fallthru
        _
      // Predicated region
      $region61: #{sunit_forward.3} parent=55 // pred_check
        %p540 = pneg %p173
      $region62: #{sunit_forward.3} parent=55 // pred_check_branch
        %542 = sbr.rel (%p540) target = $region64
      $region63: #{sunit_forward.3} parent=55 // pred_region
        %s543 = smul.u32 2, %s20
        %p544 = scmp.lt.s32.totalorder %s543, 5
        %s545 = scalar_select %p544, %s543, 5
        %s546 = smul.addr %s545, 8
        %s547 = scalar_lea.vmem %s5, %s546
      $region64: #{sunit_forward.3} parent=55 // pred_fallthru
        _
      // Predicated region
      $region65: #{sunit_forward.3} parent=55 // pred_check
        %p548 = pneg %p199
      $region66: #{sunit_forward.3} parent=55 // pred_check_branch
        %550 = sbr.rel (%p548) target = $region68
      $region67: #{sunit_forward.3} parent=55 // pred_region
        %s551 = smul.u32 2, %s20
        %p552 = scmp.lt.s32.totalorder %s551, 5
        %s553 = scalar_select %p552, %s551, 5
        %s554 = smul.addr %s553, 8
        %s555 = scalar_lea.vmem %s6, %s554
      $region68: #{sunit_forward.3} parent=55 // pred_fallthru
        _
      // Predicated region
      $region69: #{sunit_forward.3} parent=55 // pred_check
        %p556 = pneg %p225
      $region70: #{sunit_forward.3} parent=55 // pred_check_branch
        %558 = sbr.rel (%p556) target = $region72
      $region71: #{sunit_forward.3} parent=55 // pred_region
        %s559 = smul.u32 2, %s20
        %p560 = scmp.lt.s32.totalorder %s559, 5
        %s561 = scalar_select %p560, %s559, 5
        %s562 = smul.addr %s561, 8
        %s563 = scalar_lea.vmem %s7, %s562
      $region72: #{sunit_forward.3} parent=55 // pred_fallthru
        _
    $region56: #{sunit_forward.3} parent=5 // pred_fallthru
      _
  $region6: #{sunit_forward.3} parent=0 // loop_footer
    %s18 = sadd.s32 1, %s14
  $region7: #{sunit_forward.3} parent=0 // loop_footer_branch
    %13 = sbr.rel target = $region3
  $region8: #{sunit_forward.3} parent=0 // loop_exit
    _

// kernel: sunit_forward.5
$region0: #{sunit_forward.5}
  #allocation0 [shape = 'u32[]', space=smem, size = 0x4, offset = 0x4, fixed_abs, tag = 'smem constant byte address 0x4 - core index']
  #allocation1 [shape = 'u32[144,128]{1,0:T(1,128)}', space=vmem, size = 0x12000, scoped, tag = 'internal scratch']
  %s0 = inlined_call_operand.vmem [shape: f32[27,27], index: 0, kind: input, shape index: {}]
  %s1 = inlined_call_operand.vmem [shape: f32[27,256], index: 1, kind: input, shape index: {}]
  %s2 = inlined_call_operand.vmem [shape: f32[27,256], index: 2, kind: output, shape index: {}]
  %s3 = sld [smem:[#allocation0]]
  $region18: #{sunit_forward.5} parent=0
    _
  %s5 = ssub.s32 1, %s3
  %s6 = scalar_select 0, %s5, %s3
  // Predicated region
  $region2: #{sunit_forward.5} parent=0 // pred_check
    _
  $region3: #{sunit_forward.5} parent=0 // pred_check_branch
    %8 = sbr.rel (0) target = $region5
  $region4: #{sunit_forward.5} parent=0 // pred_region
    _
  $region5: #{sunit_forward.5} parent=0 // pred_fallthru
    _
  // Predicated region
  $region6: #{sunit_forward.5} parent=0 // pred_check
    _
  $region7: #{sunit_forward.5} parent=0 // pred_check_branch
    %10 = sbr.rel (0) target = $region9
  $region8: #{sunit_forward.5} parent=0 // pred_region
    _
  $region9: #{sunit_forward.5} parent=0 // pred_fallthru
    _
  %v11 = vld [vmem:[%s0] sm:$0xff]
  %v12 = vld [vmem:[%s0 + $0x8] sm:$0xff]
  %v13 = vld [vmem:[%s0 + $0x10] sm:$0xff]
  %v14 = vld [vmem:[%s0 + $0x18] sm:$0x7]
  %v15 = vld [vmem:[%s1] sm:$0xff]
  %v16 = vld [vmem:[%s1 + $0x8] sm:$0xff]
  %v17 = vld [vmem:[%s1 + $0x10] sm:$0xff]
  %v18 = vld [vmem:[%s1 + $0x18] sm:$0xff]
  %v19 = vld [vmem:[%s1 + $0x20] sm:$0xff]
  %v20 = vld [vmem:[%s1 + $0x28] sm:$0xff]
  %v21 = vld [vmem:[%s1 + $0x30] sm:$0x7]
  %v22 = vld [vmem:[%s1 + $0x38] sm:$0x7]
  %vm23 = vcmask 220160
  %v25 = vsel %vm23, %v11, 0
  %v28 = vsel %vm23, %v12, 0
  %v31 = vsel %vm23, %v13, 0
  %v34 = vsel %vm23, %v14, 0
  %vm36 = vcmask 1042432
  %v38 = vsel %vm36, %v21, 0
  %v41 = vsel %vm36, %v22, 0
  %43 = vmatprep.subr.mxu0 %v16
  %44 = vmatpush1.msra.mxu0 %v15
  %45 = vmatprep.subr.mxu0 %v18
  %46 = vmatpush1.msra.mxu0 %v17
  %47 = vmatprep.subr.mxu0 %v20
  %48 = vmatpush1.msra.mxu0 %v19
  %49 = vmatprep.subr.mxu0 %v41
  %50 = vmatpush1.msra.mxu0 %v38
  %51 = vmatprep.subr.mxu0 0.0
  %52 = vmatpush1.msra.mxu0 0.0
  %53 = vmatprep.subr.mxu0 0.0
  %54 = vmatpush1.msra.mxu0 0.0
  %55 = vmatprep.subr.mxu0 0.0
  %56 = vmatpush1.msra.mxu0 0.0
  %57 = vmatprep.subr.mxu0 0.0
  %58 = vmatpush1.msra.mxu0 0.0
  %59 = vmatprep.subr.mxu0 0.0
  %60 = vmatpush1.msra.mxu0 0.0
  %61 = vmatprep.subr.mxu0 0.0
  %62 = vmatpush1.msra.mxu0 0.0
  %63 = vmatprep.subr.mxu0 0.0
  %64 = vmatpush1.msra.mxu0 0.0
  %65 = vmatprep.subr.mxu0 0.0
  %66 = vmatpush1.msra.mxu0 0.0
  %67 = vmatprep.subr.mxu0 0.0
  %68 = vmatpush1.msra.mxu0 0.0
  %69 = vmatprep.subr.mxu0 0.0
  %70 = vmatpush1.msra.mxu0 0.0
  %71 = vmatprep.subr.mxu0 0.0
  %72 = vmatpush1.msra.mxu0 0.0
  %73 = vmatprep.subr.mxu0 0.0
  %74 = vmatpush1.msra.mxu0 0.0
  %75 = vmatprep.subr.mxu0 0.0
  %76 = vmatpush1.msra.mxu0 0.0
  %77 = vmatprep.subr.mxu0 0.0
  %78 = vmatpush1.msra.mxu0 0.0
  %79 = vmatprep.subr.mxu0 0.0
  %80 = vmatpush1.msra.mxu0 0.0
  %81 = vmatprep.subr.mxu0 0.0
  %82 = vmatpush1.msra.mxu0 0.0
  %83 = vmatprep.subr.mxu0 0.0
  %84 = vmatpush1.msra.mxu0 0.0
  %85 = vmatprep.subr.mxu0 0.0
  %86 = vmatpush1.msra.mxu0 0.0
  %87 = vmatprep.subr.mxu0 0.0
  %88 = vmatpush1.msra.mxu0 0.0
  %89 = vmatprep.subr.mxu0 0.0
  %90 = vmatpush1.msra.mxu0 0.0
  %91 = vmatprep.subr.mxu0 0.0
  %92 = vmatpush1.msra.mxu0 0.0
  %93 = vmatprep.subr.mxu0 0.0
  %94 = vmatpush1.msra.mxu0 0.0
  %95 = vmatprep.subr.mxu0 0.0
  %96 = vmatpush1.msra.mxu0 0.0
  %97 = vmatprep.subr.mxu0 0.0
  %98 = vmatpush1.msra.mxu0 0.0
  %99 = vmatprep.subr.mxu0 0.0
  %100 = vmatpush1.msra.mxu0 0.0
  %101 = vmatprep.subr.mxu0 0.0
  %102 = vmatpush1.msra.mxu0 0.0
  %103 = vmatprep.subr.mxu0 0.0
  %104 = vmatpush1.msra.mxu0 0.0
  %105 = vmatprep.subr.mxu0 0.0
  %106 = vmatpush1.msra.mxu0 0.0
  %107 = vmatprep.mubr.f32.mxu0 0.0
  %108 = vmatmul.mubr.f32.gmra.mrb[0].mxu0 %v25
  %v109 = vpop.f32.mrb[0].mxu0
  %v110 = vadd.f32 0.0, %v109
  %v111 = vpop.f32.mrb[0].mxu0
  %v112 = vadd.f32 0.0, %v111
  %113 = vmatprep.mubr.f32.mxu0 0.0
  %114 = vmatmul.mubr.f32.gmra.mrb[0].mxu0 %v28
  %v115 = vpop.f32.mrb[0].mxu0
  %v116 = vadd.f32 0.0, %v115
  %v117 = vpop.f32.mrb[0].mxu0
  %v118 = vadd.f32 0.0, %v117
  %119 = vmatprep.mubr.f32.mxu0 0.0
  %120 = vmatmul.mubr.f32.gmra.mrb[0].mxu0 %v31
  %v121 = vpop.f32.mrb[0].mxu0
  %v122 = vadd.f32 0.0, %v121
  %v123 = vpop.f32.mrb[0].mxu0
  %v124 = vadd.f32 0.0, %v123
  %125 = vmatprep.mubr.f32.mxu0 0.0
  %126 = vmatmul.mubr.f32.gmra.mrb[0].mxu0 %v34
  %v127 = vpop.f32.mrb[0].mxu0
  %v128 = vadd.f32 0.0, %v127
  %v129 = vpop.f32.mrb[0].mxu0
  %v130 = vadd.f32 0.0, %v129
  %131 = vdwg.mxu0
  %132 = vst [vmem:[%s2] sm:$0xff] %v110
  %133 = vst [vmem:[%s2 + $0x8] sm:$0xff] %v112
  %134 = vst [vmem:[%s2 + $0x10] sm:$0xff] %v116
  %135 = vst [vmem:[%s2 + $0x18] sm:$0xff] %v118
  %136 = vst [vmem:[%s2 + $0x20] sm:$0xff] %v122
  %137 = vst [vmem:[%s2 + $0x28] sm:$0xff] %v124
  %138 = vst [vmem:[%s2 + $0x30] sm:$0x7] %v128
  %139 = vst [vmem:[%s2 + $0x38] sm:$0x7] %v130
  // Predicated region
  $region10: #{sunit_forward.5} parent=0 // pred_check
    _
  $region11: #{sunit_forward.5} parent=0 // pred_check_branch
    %141 = sbr.rel (0) target = $region13
  $region12: #{sunit_forward.5} parent=0 // pred_region
    _
  $region13: #{sunit_forward.5} parent=0 // pred_fallthru
    _
  // Predicated region
  $region14: #{sunit_forward.5} parent=0 // pred_check
    _
  $region15: #{sunit_forward.5} parent=0 // pred_check_branch
    %143 = sbr.rel (0) target = $region17
  $region16: #{sunit_forward.5} parent=0 // pred_region
    _
  $region17: #{sunit_forward.5} parent=0 // pred_fallthru
    _

// kernel: custom-call.2
$region0: #{custom-call.2}
  %s0 = inlined_call_operand.vmem [shape: f32[2,3,16,16], index: 0, kind: input, shape index: {}]
  %s1 = inlined_call_operand.vmem [shape: f32[2,3,16,16], index: 1, kind: input, shape index: {}]
  %s2 = inlined_call_operand.hbm [shape: c64[2,3,16,16], index: 2, kind: output, shape index: {}]
  %s3 = scalar_lea.hbm %s2, 1536
  $region1: #{custom-call.2} parent=0
    #allocation0 [shape = 's32[1]{0}', space=sflag, size = 0x4, scoped, tag = 'scoped memory for custom-call.2']
    %4 = vsyncpa [#allocation0], 0
    %s5 = sshll.u32 %s0, 4
    %s6 = int_to_ptr.vmem [resolvable:$true] %s5
    %8 = dma.vmem_to_hbm [thread:$0]  %s6, 1536, %s2, [#allocation0]
    %9 = dma.done [#allocation0], 1536
    %10 = vsyncpa [#allocation0], 1
  $region2: #{custom-call.2} parent=0
    #allocation1 [shape = 's32[1]{0}', space=sflag, size = 0x4, scoped, tag = 'scoped memory for custom-call.2']
    %11 = vsyncpa [#allocation1], 0
    %s12 = sshll.u32 %s1, 4
    %s13 = int_to_ptr.vmem [resolvable:$true] %s12
    %15 = dma.vmem_to_hbm [thread:$0]  %s13, 1536, %s3, [#allocation1]
    %16 = dma.done [#allocation1], 1536
    %17 = vsyncpa [#allocation1], 1

</llo_original>
